<compile_context>
chip_gen: v7x
topology: tpu7x:2x2x1
jax: 0.10.0
libtpu: 0.0.40
codegen_flags: <defaults>
</compile_context>

<pallas_src>
from functools import partial

import jax
import jax.numpy as jnp
from jax.experimental import pallas as pl
from jax.experimental.pallas import tpu as pltpu


def _round_up(x, m):
    return (x + m - 1) // m * m


def _vmem_budget_bytes():
    """Per-generation VMEM budget: ~75% of physical, capped at 100 MiB.
    v7x (64 MiB) -> ~48 MiB; v5e/v6e (128 MiB) -> ~96-100 MiB."""
    cap = 64 * 1024 * 1024  # conservative fallback (v7x-sized)
    try:
        info = pltpu.get_tpu_info()
        cap = int(getattr(info, "vmem_capacity_bytes", cap))
    except Exception:
        pass
    return int(min(cap * 3 // 4, 100 * 1024 * 1024))


# --------------------------------------------------------------------------- #
# Kernels
# --------------------------------------------------------------------------- #
def _embed_kernel(x_ref, w_ref, pos_ref, o_ref):
    """Resident-weight path (whole K fits VMEM): matmul + add, no scratch.
    x_ref:   (1, TILE_P, Kp)   bf16 patch rows (one batch element)
    w_ref:   (Kp, TILE_H)      bf16 flattened conv weight (constant block)
    pos_ref: (TILE_P, TILE_H)  f32 position embeddings (+ folded conv bias)
    o_ref:   (1, TILE_P, TILE_H)"""
    o_ref[0] = (
        jnp.dot(x_ref[0], w_ref[...], preferred_element_type=jnp.float32)
        + pos_ref[...]
    ).astype(o_ref.dtype)


def _embed_kernel_kred(x_ref, w_ref, pos_ref, o_ref, acc_ref):
    """K-tiled fallback (huge C*ph*pw): reduction axis last, f32 accumulator."""
    k = pl.program_id(3)

    @pl.when(k == 0)
    def _():
        acc_ref[...] = jnp.zeros_like(acc_ref)

    acc_ref[...] += jnp.dot(x_ref[0], w_ref[...],
                            preferred_element_type=jnp.float32)

    @pl.when(k == pl.num_programs(3) - 1)
    def _():
        o_ref[0] = (acc_ref[...] + pos_ref[...]).astype(o_ref.dtype)


# --------------------------------------------------------------------------- #
# Wrapper (patchify/pad fused with the pallas_call under one jit)
# --------------------------------------------------------------------------- #
@partial(jax.jit, static_argnames=("patch_size", "out_dtype"))
def patch_embeddings_pallas(x_nchw, conv_w, conv_b, pos_emb, *, patch_size,
                            out_dtype=jnp.bfloat16):
    """x_nchw: (B, C, H, W). conv_w: (hidden, C, ph, pw) [PyTorch layout].
       conv_b: (hidden,). pos_emb: (1, n_patches, hidden)."""
    B, C, H, W = x_nchw.shape
    ph, pw = patch_size
    hidden = conv_w.shape[0]
    gh, gw = H // ph, W // pw
    n_patches = gh * gw
    K = C * ph * pw
    out_itemsize = jnp.dtype(out_dtype).itemsize

    # ---- tiling decisions (static; shapes known at trace time) --------------
    Hp_full = _round_up(hidden, 128)          # output lane dim
    Kp0 = _round_up(K, 128)
    Np0 = _round_up(n_patches, 16)            # bf16 sublane packing

    budget = _vmem_budget_bytes()
    tile_budget = budget - (4 << 20)          # Mosaic-internal headroom

    # Keep the whole (K, hidden) weight resident whenever it fits: constant
    # block index => DMA'd once instead of once per batch/patch tile, and the
    # K reduction (acc scratch + predicated epilogue) disappears.
    weight_resident = Kp0 * Hp_full * 2 <= min(tile_budget // 3, 16 << 20)
    if weight_resident:
        TILE_K, num_kt, Kp = Kp0, 1, Kp0
    else:
        num_kt = pl.cdiv(Kp0, 1024)
        TILE_K = _round_up(pl.cdiv(Kp0, num_kt), 256)   # feed the 256x256 MXU
        num_kt = pl.cdiv(Kp0, TILE_K)
        Kp = TILE_K * num_kt

    def est(tp, th):
        b = 2 * tp * TILE_K * 2            # x tiles, bf16, double-buffered
        b += 2 * TILE_K * th * 2           # weight tiles, bf16
        b += 2 * tp * th * 4               # pos tiles, f32
        b += 2 * tp * th * out_itemsize    # output tiles
        if not weight_resident:
            b += tp * th * 4               # f32 accumulator scratch
        return b

    # Tile hidden only when an untiled Hp cannot fit (huge hidden on v7x).
    TILE_H = Hp_full
    while TILE_H > 128 and est(16, TILE_H) > tile_budget:
        TILE_H = _round_up(TILE_H // 2, 128)
    num_ht = pl.cdiv(Hp_full, TILE_H)
    Hp = TILE_H * num_ht

    # Patch-row tile: largest of {1024, 512, 256, ...} that fits the budget
    # (>=512 rows ~85% of HBM roofline; amortizes ~0.35us per-grid-step cost).
    target = 16
    for cand in (1024, 512, 256, 128, 64, 32, 16):
        if est(cand, TILE_H) <= tile_budget:
            target = cand
            break
    num_pt = pl.cdiv(Np0, target)
    TILE_P = _round_up(pl.cdiv(Np0, num_pt), 16)
    # v7x megacore: keep the parallel grid extent >= 2 when possible.
    if B * num_pt * num_ht < 2 and Np0 >= 32:
        num_pt = 2
        TILE_P = _round_up(pl.cdiv(Np0, num_pt), 16)
    Np = TILE_P * num_pt

    vmem_limit = int(min(budget,
                         max(2 * est(TILE_P, TILE_H) + (8 << 20), 32 << 20)))

    # ---- layout glue (fused into this jit: cast/patchify/pad = one pass) ----
    # Inner ordering (c, kh, kw) matches PyTorch Conv2d weight flattening;
    # patch ordering is row-major over (gh, gw) to match flatten(2).
    xb = x_nchw.astype(jnp.bfloat16)
    xp = xb.reshape(B, C, gh, ph, gw, pw)
    xp = jnp.transpose(xp, (0, 2, 4, 1, 3, 5)).reshape(B, n_patches, K)
    xp = jnp.pad(xp, ((0, 0), (0, Np - n_patches), (0, Kp - K)))

    w_flat = conv_w.reshape(hidden, K).T.astype(jnp.bfloat16)        # (K, hidden)
    w_pad = jnp.pad(w_flat, ((0, Kp - K), (0, Hp - hidden)))
    # Fold conv bias into the (f32) position embeddings: exact, one fewer
    # operand stream and one fewer VPU add inside the kernel.
    pos2 = (pos_emb.reshape(n_patches, hidden).astype(jnp.float32)
            + conv_b.reshape(1, hidden).astype(jnp.float32))
    pos_pad = jnp.pad(pos2, ((0, Np - n_patches), (0, Hp - hidden)))

    if weight_resident:
        # h outermost: the weight block is DMA'd once per h value (usually once).
        grid = (num_ht, B, num_pt)
        out = pl.pallas_call(
            _embed_kernel,
            out_shape=jax.ShapeDtypeStruct((B, Np, Hp), out_dtype),
            grid_spec=pltpu.PrefetchScalarGridSpec(
                num_scalar_prefetch=0,
                grid=grid,
                in_specs=[
                    pl.BlockSpec((1, TILE_P, Kp), lambda h, b, p: (b, p, 0)),
                    pl.BlockSpec((Kp, TILE_H), lambda h, b, p: (0, h)),
                    pl.BlockSpec((TILE_P, TILE_H), lambda h, b, p: (p, h)),
                ],
                out_specs=pl.BlockSpec((1, TILE_P, TILE_H),
                                       lambda h, b, p: (b, p, h)),
            ),
            compiler_params=pltpu.CompilerParams(
                dimension_semantics=("parallel", "parallel", "parallel"),
                vmem_limit_bytes=vmem_limit,
            ),
        )(xp, w_pad, pos_pad)
    else:
        grid = (num_pt, B, num_ht, num_kt)   # reduction axis last
        out = pl.pallas_call(
            _embed_kernel_kred,
            out_shape=jax.ShapeDtypeStruct((B, Np, Hp), out_dtype),
            grid_spec=pltpu.PrefetchScalarGridSpec(
                num_scalar_prefetch=0,
                grid=grid,
                in_specs=[
                    pl.BlockSpec((1, TILE_P, TILE_K),
                                 lambda p, b, h, k: (b, p, k)),
                    pl.BlockSpec((TILE_K, TILE_H),
                                 lambda p, b, h, k: (k, h)),
                    pl.BlockSpec((TILE_P, TILE_H),
                                 lambda p, b, h, k: (p, h)),
                ],
                out_specs=pl.BlockSpec((1, TILE_P, TILE_H),
                                       lambda p, b, h, k: (b, p, h)),
                scratch_shapes=[pltpu.VMEM((TILE_P, TILE_H), jnp.float32)],
            ),
            compiler_params=pltpu.CompilerParams(
                dimension_semantics=("parallel", "parallel", "parallel",
                                     "arbitrary"),
                vmem_limit_bytes=vmem_limit,
            ),
        )(xp, w_pad, pos_pad)

    if Np != n_patches or Hp != hidden:
        out = out[:, :n_patches, :hidden]
    return out


def embeddings_forward(x, conv_w, conv_b, pos_emb, patch_size,
                       out_dtype=jnp.bfloat16):
    """Matches Embeddings.forward (non-hybrid): returns (embeddings, None)."""
    emb = patch_embeddings_pallas(x, conv_w, conv_b, pos_emb,
                                  patch_size=patch_size, out_dtype=out_dtype)
    return emb, None


def reference_embeddings(x_nchw, conv_w, conv_b, pos_emb, patch_size):
    """Pure-JAX f32 reference of the PyTorch forward (dropout = identity)."""
    ph, pw = patch_size
    y = jax.lax.conv_general_dilated(
        x_nchw, conv_w, window_strides=(ph, pw), padding="VALID",
        dimension_numbers=("NCHW", "OIHW", "NCHW"))
    y = y + conv_b.reshape(1, -1, 1, 1)
    B, hid, gh, gw = y.shape
    y = y.reshape(B, hid, gh * gw)            # flatten(2)
    y = jnp.transpose(y, (0, 2, 1))           # transpose(-1, -2)
    return y + pos_emb


if __name__ == "__main__":
    # Small, forward-consistent shapes: img_size=16, patch=4 -> n_patches=16
    B, C, HW = 2, 3, 16
    patch = (4, 4)
    hidden = 32
    n_patches = (HW // patch[0]) * (HW // patch[1])

    key = jax.random.PRNGKey(0)
    kx, kw, kb, kp = jax.random.split(key, 4)
    x = jax.random.normal(kx, (B, C, HW, HW), dtype=jnp.float32)
    # PyTorch inits pos-emb to zeros; use small randoms so the add path is exercised.
    conv_w = 0.05 * jax.random.normal(kw, (hidden, C, patch[0], patch[1]), jnp.float32)
    conv_b = 0.05 * jax.random.normal(kb, (hidden,), jnp.float32)
    pos_emb = 0.02 * jax.random.normal(kp, (1, n_patches, hidden), jnp.float32)

    emb, features = embeddings_forward(x, conv_w, conv_b, pos_emb, patch)
    emb = jax.block_until_ready(emb)

    ref = reference_embeddings(x, conv_w, conv_b, pos_emb, patch)
    assert emb.shape == (B, n_patches, hidden)
    assert features is None
    # bf16 matmul operands / bf16 output with f32 accumulate: compare against
    # the f32 reference with a tolerance matching bf16 rounding.
    assert jnp.allclose(emb.astype(jnp.float32), ref, atol=3e-2, rtol=3e-2)

    print("KERNEL_OK")
</pallas_src>

<mosaic_0001>
module attributes {stable_mosaic.version = 11 : i64} {
  func.func @_embed_kernel(%arg0: i32, %arg1: i32, %arg2: i32, %arg3: memref<1x16x128xbf16, #tpu.memory_space<vmem>>, %arg4: memref<128x128xbf16, #tpu.memory_space<vmem>>, %arg5: memref<16x128xf32, #tpu.memory_space<vmem>>, %arg6: memref<1x16x128xbf16, #tpu.memory_space<vmem>>) attributes {dimension_semantics = [#tpu.dimension_semantics<parallel>, #tpu.dimension_semantics<parallel>, #tpu.dimension_semantics<parallel>], iteration_bounds = array<i64: 1, 2, 1>, scalar_prefetch = 0 : i64, scratch_operands = 0 : i64, tpu.core_type = #tpu.core_type<tc>, window_params = [{transform_indices = @transform_0, window_bounds = array<i64: 1, 16, 128>}, {transform_indices = @transform_1, window_bounds = array<i64: 128, 128>}, {transform_indices = @transform_2, window_bounds = array<i64: 16, 128>}, {transform_indices = @transform_3, window_bounds = array<i64: 1, 16, 128>}]} {
    %c0 = arith.constant 0 : index
    %c0_0 = arith.constant 0 : index
    %c0_1 = arith.constant 0 : index
    %0 = vector.load %arg3[%c0, %c0_0, %c0_1] : memref<1x16x128xbf16, #tpu.memory_space<vmem>>, vector<1x16x128xbf16>
    %1 = vector.shape_cast %0 : vector<1x16x128xbf16> to vector<16x128xbf16>
    %c0_2 = arith.constant 0 : index
    %c0_3 = arith.constant 0 : index
    %2 = vector.load %arg4[%c0_2, %c0_3] : memref<128x128xbf16, #tpu.memory_space<vmem>>, vector<128x128xbf16>
    %cst = arith.constant dense<0.000000e+00> : vector<16x128xf32>
    %3 = tpu.matmul %1, %2, %cst {dimension_numbers = #tpu.dot_dimension_numbers<[1], [0], [0], [1], [0, 0, 1, 1], [], []>} : vector<16x128xbf16>, vector<128x128xbf16>, vector<16x128xf32> -> vector<16x128xf32>
    %c0_4 = arith.constant 0 : index
    %c0_5 = arith.constant 0 : index
    %4 = vector.load %arg5[%c0_4, %c0_5] : memref<16x128xf32, #tpu.memory_space<vmem>>, vector<16x128xf32>
    %5 = arith.addf %3, %4 : vector<16x128xf32>
    %6 = arith.truncf %5 : vector<16x128xf32> to vector<16x128xbf16>
    %c0_6 = arith.constant 0 : index
    %c0_7 = arith.constant 0 : index
    %c0_8 = arith.constant 0 : index
    %7 = vector.load %arg6[%c0_6, %c0_7, %c0_8] : memref<1x16x128xbf16, #tpu.memory_space<vmem>>, vector<1x16x128xbf16>
    %8 = vector.shape_cast %7 : vector<1x16x128xbf16> to vector<16x128xbf16>
    %9 = vector.shape_cast %6 : vector<16x128xbf16> to vector<1x16x128xbf16>
    tpu.vector_store %arg6[%c0_6, %c0_7, %c0_8], %9 {strides = array<i32>} : memref<1x16x128xbf16, #tpu.memory_space<vmem>>, vector<1x16x128xbf16>,
    return
  }
  func.func @transform_0(%arg0: i32, %arg1: i32, %arg2: i32) -> (i32, i32, i32) {
    %c0_i32 = arith.constant 0 : i32
    %c0_i32_0 = arith.constant 0 : i32
    return %arg1, %arg2, %c0_i32 : i32, i32, i32
  }
  func.func @transform_1(%arg0: i32, %arg1: i32, %arg2: i32) -> (i32, i32) {
    %c0_i32 = arith.constant 0 : i32
    %c0_i32_0 = arith.constant 0 : i32
    return %c0_i32, %arg0 : i32, i32
  }
  func.func @transform_2(%arg0: i32, %arg1: i32, %arg2: i32) -> (i32, i32) {
    %c0_i32 = arith.constant 0 : i32
    return %arg2, %arg0 : i32, i32
  }
  func.func @transform_3(%arg0: i32, %arg1: i32, %arg2: i32) -> (i32, i32, i32) {
    %c0_i32 = arith.constant 0 : i32
    return %arg1, %arg2, %arg0 : i32, i32, i32
  }
}

</mosaic_0001>

<llo_original>
// kernel: patch_embeddings_pallas.1
$region0: #{patch_embeddings_pallas.1}
  #allocation0 [shape = 'u32[]', space=smem, size = 0x4, offset = 0x4, fixed_abs, tag = 'smem constant byte address 0x4 - core index']
  #allocation1 [shape = 'u32[144,128]{1,0:T(1,128)}', space=vmem, size = 0x12000, scoped, tag = 'internal scratch']
  %s0 = inlined_call_operand.vmem [shape: bf16[2,16,128], index: 0, kind: input, shape index: {}]
  %s1 = inlined_call_operand.vmem [shape: bf16[128,128], index: 1, kind: input, shape index: {}]
  %s2 = inlined_call_operand.vmem [shape: f32[16,128], index: 2, kind: input, shape index: {}]
  %s3 = inlined_call_operand.hbm [shape: bf16[2,16,128], index: 3, kind: output, shape index: {}]
  %s4 = sld [smem:[#allocation0]]
  $region45: #{patch_embeddings_pallas.1} parent=0
    _
  %s6 = ssub.s32 1, %s4
  %s7 = scalar_select 0, %s6, %s4
  $region1: #{patch_embeddings_pallas.1} parent=0
    #allocation2 [shape = 'u8[8192]{0}', space=vmem, size = 0x2000, scoped, tag = 'output window, operand 0']
    #allocation3 [shape = 's32[2]{0}', space=sflag, size = 0x8, scoped, tag = 'scoped memory for patch_embeddings_pallas.1']
    %8 = vsyncpa [#allocation3], 0
    %s9 = scalar_lea.sflag [#allocation3], 1
    %10 = vsyncpa %s9, 0
    loop: start=0, step=1, limit=4
    $region2: #{patch_embeddings_pallas.1} parent=1 // loop_pre_header
      _
    $region3: #{patch_embeddings_pallas.1} parent=1 // loop_header
      %s12 = sphi 0, %s16
      %p13 = scmp.ge.s32.totalorder %s12, 4
      %s19 = sphi 0, %s38
      %s20 = sphi 0, %s34
      %s21 = sphi 0, %s30
      %s22 = sphi 0, %s19
      %s23 = sphi 0, %s20
      %s24 = sphi 0, %s21
      %s25 = sphi 0, %s22
      %s26 = sphi 0, %s23
      %s27 = sphi 0, %s24
      %s43 = sphi 0, %s45
      %s46 = sphi 0, %s43
      %s47 = sphi 0, %s46
      %s63 = sphi 0, %s47
      %s69 = sphi 0, %s71
      %s72 = sphi 0, %s69
      %s73 = sphi 0, %s72
      %s89 = sphi 0, %s73
      %s97 = sphi 0, %s99
      %s100 = sphi 0, %s97
      %s101 = sphi 0, %s100
      %s117 = sphi 0, %s101
      %s127 = sphi 0, %s129
      %s130 = sphi 0, %s127
      %s131 = sphi 0, %s130
      %s147 = sphi 0, %s131
    $region4: #{patch_embeddings_pallas.1} parent=1 // loop_header_branch
      %15 = sbr.rel (%p13) target = $region8
    $region5: #{patch_embeddings_pallas.1} parent=1 // loop_body
      %s17 = ssub.s32 %s12, 1
      %s18 = ssub.s32 %s12, 2
      %s28 = sadd.s32 1, %s21
      %p29 = scmp.ge.s32.totalorder %s28, 1
      %s30 = scalar_select %p29, 0, %s28
      %s31 = sadd.s32 1, %s20
      %s32 = scalar_select %p29, %s31, %s20
      %p33 = scmp.ge.s32.totalorder %s32, 2
      %s34 = scalar_select %p33, 0, %s32
      %s35 = sadd.s32 1, %s19
      %s36 = scalar_select %p33, %s35, %s19
      %p37 = scmp.ge.s32.totalorder %s36, 1
      %s38 = scalar_select %p37, 0, %s36
      %s39 = ssub.s32 %s20, %s34
      %s40 = ssub.s32 %s21, %s30
      %s41 = sor.u32 %s39, %s40
      %p42 = scmp.eq.s32.totalorder %s41, 0
      %s44 = sadd.s32 %s43, 1
      %s45 = scalar_select %p42, %s43, %s44
      %p48 = pneg %p42
      %p49 = scmp.eq.s32.totalorder %s12, 1
      %p50 = por %p48, %p49
      %p51 = scmp.ne.s32.totalorder %s43, %s46
      %p52 = scmp.eq.s32.totalorder %s12, 0
      %p53 = por %p51, %p52
      %p54 = scmp.ne.s32.totalorder %s43, %s46
      %p55 = scmp.eq.s32.totalorder %s17, 1
      %p56 = por %p54, %p55
      %p57 = scmp.ne.s32.totalorder %s46, %s47
      %p58 = scmp.eq.s32.totalorder %s17, 0
      %p59 = por %p57, %p58
      %p60 = scmp.ne.s32.totalorder %s46, %s47
      %p61 = scmp.eq.s32.totalorder %s18, 1
      %p62 = por %p60, %p61
      %p64 = scmp.ne.s32.totalorder %s47, %s63
      %p65 = scmp.eq.s32.totalorder %s18, 0
      %p66 = por %p64, %p65
      %s67 = ssub.s32 %s19, %s38
      %p68 = scmp.eq.s32.totalorder %s67, 0
      %s70 = sadd.s32 %s69, 1
      %s71 = scalar_select %p68, %s69, %s70
      %p74 = pneg %p68
      %p75 = scmp.eq.s32.totalorder %s12, 1
      %p76 = por %p74, %p75
      %p77 = scmp.ne.s32.totalorder %s69, %s72
      %p78 = scmp.eq.s32.totalorder %s12, 0
      %p79 = por %p77, %p78
      %p80 = scmp.ne.s32.totalorder %s69, %s72
      %p81 = scmp.eq.s32.totalorder %s17, 1
      %p82 = por %p80, %p81
      %p83 = scmp.ne.s32.totalorder %s72, %s73
      %p84 = scmp.eq.s32.totalorder %s17, 0
      %p85 = por %p83, %p84
      %p86 = scmp.ne.s32.totalorder %s72, %s73
      %p87 = scmp.eq.s32.totalorder %s18, 1
      %p88 = por %p86, %p87
      %p90 = scmp.ne.s32.totalorder %s73, %s89
      %p91 = scmp.eq.s32.totalorder %s18, 0
      %p92 = por %p90, %p91
      %s93 = ssub.s32 %s21, %s30
      %s94 = ssub.s32 %s19, %s38
      %s95 = sor.u32 %s93, %s94
      %p96 = scmp.eq.s32.totalorder %s95, 0
      %s98 = sadd.s32 %s97, 1
      %s99 = scalar_select %p96, %s97, %s98
      %p102 = pneg %p96
      %p103 = scmp.eq.s32.totalorder %s12, 1
      %p104 = por %p102, %p103
      %p105 = scmp.ne.s32.totalorder %s97, %s100
      %p106 = scmp.eq.s32.totalorder %s12, 0
      %p107 = por %p105, %p106
      %p108 = scmp.ne.s32.totalorder %s97, %s100
      %p109 = scmp.eq.s32.totalorder %s17, 1
      %p110 = por %p108, %p109
      %p111 = scmp.ne.s32.totalorder %s100, %s101
      %p112 = scmp.eq.s32.totalorder %s17, 0
      %p113 = por %p111, %p112
      %p114 = scmp.ne.s32.totalorder %s100, %s101
      %p115 = scmp.eq.s32.totalorder %s18, 1
      %p116 = por %p114, %p115
      %p118 = scmp.ne.s32.totalorder %s101, %s117
      %p119 = scmp.eq.s32.totalorder %s18, 0
      %p120 = por %p118, %p119
      %s121 = ssub.s32 %s20, %s34
      %s122 = ssub.s32 %s21, %s30
      %s123 = sor.u32 %s121, %s122
      %s124 = ssub.s32 %s19, %s38
      %s125 = sor.u32 %s123, %s124
      %p126 = scmp.eq.s32.totalorder %s125, 0
      %s128 = sadd.s32 %s127, 1
      %s129 = scalar_select %p126, %s127, %s128
      %p132 = pneg %p126
      %p133 = scmp.eq.s32.totalorder %s12, 1
      %p134 = por %p132, %p133
      %p135 = scmp.ne.s32.totalorder %s127, %s130
      %p136 = scmp.eq.s32.totalorder %s12, 0
      %p137 = por %p135, %p136
      %p138 = scmp.ne.s32.totalorder %s127, %s130
      %p139 = scmp.eq.s32.totalorder %s17, 1
      %p140 = por %p138, %p139
      %p141 = scmp.ne.s32.totalorder %s130, %s131
      %p142 = scmp.eq.s32.totalorder %s17, 0
      %p143 = por %p141, %p142
      %p144 = scmp.ne.s32.totalorder %s130, %s131
      %p145 = scmp.eq.s32.totalorder %s18, 1
      %p146 = por %p144, %p145
      %p148 = scmp.ne.s32.totalorder %s131, %s147
      %p149 = scmp.eq.s32.totalorder %s18, 0
      %p150 = por %p148, %p149
      %p151 = scmp.le.s32.totalorder 1, %s12
      %p152 = scmp.lt.s32.totalorder %s12, 3
      %p153 = pnand %p151, %p152
      %p154 = pneg %p153
      // Predicated region
      $region9: #{patch_embeddings_pallas.1} parent=5 // pred_check
        _
      $region10: #{patch_embeddings_pallas.1} parent=5 // pred_check_branch
        %156 = sbr.rel (%p153) target = $region12
      $region11: #{patch_embeddings_pallas.1} parent=5 // pred_region
        %s157 = ssub.s32 %s12, 1
        // Predicated region
        $region13: #{patch_embeddings_pallas.1} parent=11 // pred_check
          %p158 = pneg %p85
        $region14: #{patch_embeddings_pallas.1} parent=11 // pred_check_branch
          %160 = sbr.rel (%p158) target = $region16
        $region15: #{patch_embeddings_pallas.1} parent=11 // pred_region
          %p161 = scmp.lt.s32.totalorder %s22, 0
          %s162 = scalar_select %p161, %s22, 0
          %s163 = smul.addr %s162, 4
          %s164 = scalar_lea.vmem %s1, %s163
        $region16: #{patch_embeddings_pallas.1} parent=11 // pred_fallthru
          _
        // Predicated region
        $region17: #{patch_embeddings_pallas.1} parent=11 // pred_check
          %p165 = pneg %p113
        $region18: #{patch_embeddings_pallas.1} parent=11 // pred_check_branch
          %167 = sbr.rel (%p165) target = $region20
        $region19: #{patch_embeddings_pallas.1} parent=11 // pred_region
          %s168 = smul.u32 2, %s24
          %p169 = scmp.lt.s32.totalorder %s168, 1
          %s170 = scalar_select %p169, %s168, 1
          %p171 = scmp.lt.s32.totalorder %s22, 0
          %s172 = scalar_select %p171, %s22, 0
          %s173 = sadd.s32 %s172, %s170
          %s174 = smul.addr %s173, 8
          %s175 = scalar_lea.vmem %s2, %s174
          %s176 = smul.u32 2, %s24
        $region20: #{patch_embeddings_pallas.1} parent=11 // pred_fallthru
          _
      $region12: #{patch_embeddings_pallas.1} parent=5 // pred_fallthru
        _
      %p177 = scmp.lt.s32.totalorder %s12, 2
      // Predicated region
      $region21: #{patch_embeddings_pallas.1} parent=5 // pred_check
        %p178 = pneg %p177
      $region22: #{patch_embeddings_pallas.1} parent=5 // pred_check_branch
        %180 = sbr.rel (%p178) target = $region24
      $region23: #{patch_embeddings_pallas.1} parent=5 // pred_region
        // Predicated region
        $region25: #{patch_embeddings_pallas.1} parent=23 // pred_check
          %p181 = pneg %p53
        $region26: #{patch_embeddings_pallas.1} parent=23 // pred_check_branch
          %183 = sbr.rel (%p181) target = $region28
        $region27: #{patch_embeddings_pallas.1} parent=23 // pred_region
          %s184 = smul.u32 2, %s21
          %p185 = scmp.lt.s32.totalorder %s20, 1
          %s186 = scalar_select %p185, %s20, 1
          %p187 = scmp.lt.s32.totalorder %s184, 1
          %s188 = scalar_select %p187, %s184, 1
          %s189 = smul.addr %s186, 2
          %s190 = sadd.s32 %s188, %s189
          %s191 = smul.addr %s190, 4
          %s192 = scalar_lea.vmem %s0, %s191
          %s193 = smul.u32 2, %s21
        $region28: #{patch_embeddings_pallas.1} parent=23 // pred_fallthru
          _
      $region24: #{patch_embeddings_pallas.1} parent=5 // pred_fallthru
        _
      %p194 = scmp.le.s32.totalorder 1, %s12
      %p195 = scmp.lt.s32.totalorder %s12, 3
      %p196 = pnand %p194, %p195
      %p197 = pneg %p196
      // Predicated region
      $region29: #{patch_embeddings_pallas.1} parent=5 // pred_check
        _
      $region30: #{patch_embeddings_pallas.1} parent=5 // pred_check_branch
        %199 = sbr.rel (%p196) target = $region32
      $region31: #{patch_embeddings_pallas.1} parent=5 // pred_region
        %s200 = ssub.s32 %s12, 1
        %s201 = smul.u32 2, %s24
        %p202 = scmp.lt.s32.totalorder %s23, 1
        %s203 = scalar_select %p202, %s23, 1
        %p204 = scmp.lt.s32.totalorder %s201, 1
        %s205 = scalar_select %p204, %s201, 1
        %s206 = smul.addr %s203, 2
        %s207 = sadd.s32 %s205, %s206
        %s208 = smul.addr %s207, 4
        %s209 = scalar_lea.vmem %s0, %s208
        %p210 = pneg %p59
        %p211 = pneg %p56
        %p212 = scmp.lt.s32.totalorder %s22, 0
        %s213 = scalar_select %p212, %s22, 0
        %s214 = smul.addr %s213, 4
        %s215 = scalar_lea.vmem %s1, %s214
        %p216 = pneg %p85
        %p217 = pneg %p82
        %s218 = smul.u32 2, %s24
        %p219 = scmp.lt.s32.totalorder %s218, 1
        %s220 = scalar_select %p219, %s218, 1
        %p221 = scmp.lt.s32.totalorder %s22, 0
        %s222 = scalar_select %p221, %s22, 0
        %s223 = sadd.s32 %s222, %s220
        %s224 = smul.addr %s223, 8
        %s225 = scalar_lea.vmem %s2, %s224
        %p226 = pneg %p113
        %p227 = pneg %p110
        %p228 = pneg %p143
        %p229 = pneg %p140
        %s230 = sand.u32 %s130, 1
        %s231 = scalar_lea.sflag [#allocation3], %s230
        %s232 = sand.u32 %s130, 1
        %s233 = smul.addr %s232, 8
        %s234 = scalar_lea.vmem [#allocation2], %s233
        %s235 = smul.u32 2, %s24
        %p236 = scmp.lt.s32.totalorder %s23, 1
        %s237 = scalar_select %p236, %s23, 1
        %p238 = scmp.lt.s32.totalorder %s235, 1
        %s239 = scalar_select %p238, %s235, 1
        %s240 = smul.addr %s237, 2
        %s241 = sadd.s32 %s239, %s240
        %s242 = smul.addr %s241, 4
        %s243 = scalar_lea.vmem %s0, %s242
        %s244 = smul.u32 2, %s24
        %p245 = scmp.lt.s32.totalorder %s22, 0
        %s246 = scalar_select %p245, %s22, 0
        %s247 = smul.addr %s246, 4
        %s248 = scalar_lea.vmem %s1, %s247
        %s249 = smul.u32 2, %s24
        %p250 = scmp.lt.s32.totalorder %s249, 1
        %s251 = scalar_select %p250, %s249, 1
        %p252 = scmp.lt.s32.totalorder %s22, 0
        %s253 = scalar_select %p252, %s22, 0
        %s254 = sadd.s32 %s253, %s251
        %s255 = smul.addr %s254, 8
        %s256 = scalar_lea.vmem %s2, %s255
        %s257 = smul.u32 2, %s24
        %s258 = smul.u32 2, %s24
        %v260 = vld [vmem:[%s243] sm:$0xf]
        %v261 = vld [vmem:[%s243 + $0x4] sm:$0xf]
        %v262 = vld [vmem:[%s248] sm:$0xf]
        %v263 = vld [vmem:[%s248 + $0x4] sm:$0xf]
        %v264 = vld [vmem:[%s248 + $0x8] sm:$0xf]
        %v265 = vld [vmem:[%s248 + $0xc] sm:$0xf]
        %v266 = vld [vmem:[%s248 + $0x10] sm:$0xf]
        %v267 = vld [vmem:[%s248 + $0x14] sm:$0xf]
        %v268 = vld [vmem:[%s248 + $0x18] sm:$0xf]
        %v269 = vld [vmem:[%s248 + $0x1c] sm:$0xf]
        %v270 = vld [vmem:[%s248 + $0x20] sm:$0xf]
        %v271 = vld [vmem:[%s248 + $0x24] sm:$0xf]
        %v272 = vld [vmem:[%s248 + $0x28] sm:$0xf]
        %v273 = vld [vmem:[%s248 + $0x2c] sm:$0xf]
        %v274 = vld [vmem:[%s248 + $0x30] sm:$0xf]
        %v275 = vld [vmem:[%s248 + $0x34] sm:$0xf]
        %v276 = vld [vmem:[%s248 + $0x38] sm:$0xf]
        %v277 = vld [vmem:[%s248 + $0x3c] sm:$0xf]
        %v278 = vld [vmem:[%s256] sm:$0xff]
        %v279 = vld [vmem:[%s256 + $0x8] sm:$0xff]
        %v282 = vunpack.c.l.b16 %v260
        %v283 = vunpack.c.l.b16 %v261
        %v284 = vpack.c.b16 %v283, %v282
        %v302 = vunpack.c.l.b16 %v262
        %v303 = vunpack.c.l.b16 %v263
        %v304 = vunpack.c.l.b16 %v264
        %v305 = vunpack.c.l.b16 %v265
        %v306 = vunpack.c.l.b16 %v266
        %v307 = vunpack.c.l.b16 %v267
        %v308 = vunpack.c.l.b16 %v268
        %v309 = vunpack.c.l.b16 %v269
        %v310 = vunpack.c.l.b16 %v270
        %v311 = vunpack.c.l.b16 %v271
        %v312 = vunpack.c.l.b16 %v272
        %v313 = vunpack.c.l.b16 %v273
        %v314 = vunpack.c.l.b16 %v274
        %v315 = vunpack.c.l.b16 %v275
        %v316 = vunpack.c.l.b16 %v276
        %v317 = vunpack.c.l.b16 %v277
        %v318 = vpack.c.b16 %v303, %v302
        %v319 = vpack.c.b16 %v305, %v304
        %v320 = vpack.c.b16 %v307, %v306
        %v321 = vpack.c.b16 %v309, %v308
        %v322 = vpack.c.b16 %v311, %v310
        %v323 = vpack.c.b16 %v313, %v312
        %v324 = vpack.c.b16 %v315, %v314
        %v325 = vpack.c.b16 %v317, %v316
        %334 = vmatprep.subr.bf16.mxu0 0
        %335 = vmatpush1.bf16.msra.mxu0 %v318
        %336 = vmatprep.subr.bf16.mxu0 0
        %337 = vmatpush1.bf16.msra.mxu0 %v319
        %338 = vmatprep.subr.bf16.mxu0 0
        %339 = vmatpush1.bf16.msra.mxu0 %v320
        %340 = vmatprep.subr.bf16.mxu0 0
        %341 = vmatpush1.bf16.msra.mxu0 %v321
        %342 = vmatprep.subr.bf16.mxu0 0
        %343 = vmatpush1.bf16.msra.mxu0 %v322
        %344 = vmatprep.subr.bf16.mxu0 0
        %345 = vmatpush1.bf16.msra.mxu0 %v323
        %346 = vmatprep.subr.bf16.mxu0 0
        %347 = vmatpush1.bf16.msra.mxu0 %v324
        %348 = vmatprep.subr.bf16.mxu0 0
        %349 = vmatpush1.bf16.msra.mxu0 %v325
        %350 = vmatprep.subr.bf16.mxu0 0
        %351 = vmatpush1.bf16.msra.mxu0 0
        %352 = vmatprep.subr.bf16.mxu0 0
        %353 = vmatpush1.bf16.msra.mxu0 0
        %354 = vmatprep.subr.bf16.mxu0 0
        %355 = vmatpush1.bf16.msra.mxu0 0
        %356 = vmatprep.subr.bf16.mxu0 0
        %357 = vmatpush1.bf16.msra.mxu0 0
        %358 = vmatprep.subr.bf16.mxu0 0
        %359 = vmatpush1.bf16.msra.mxu0 0
        %360 = vmatprep.subr.bf16.mxu0 0
        %361 = vmatpush1.bf16.msra.mxu0 0
        %362 = vmatprep.subr.bf16.mxu0 0
        %363 = vmatpush1.bf16.msra.mxu0 0
        %364 = vmatprep.subr.bf16.mxu0 0
        %365 = vmatpush1.bf16.msra.mxu0 0
        %366 = vmatprep.mubr.bf16.mxu0 0
        %367 = vmatmul.mubr.bf16.gmra.mrb[0].mxu0 %v284
        %v368 = vpop.f32.mrb[0].mxu0
        %v369 = vadd.f32 %v278, %v368
        %v370 = vpop.f32.mrb[0].mxu0
        %v371 = vpop.f32.mrb[0].mxu0
        %v372 = vadd.f32 %v279, %v371
        %v373 = vpop.f32.mrb[0].mxu0
        %374 = vdwg.mxu0
        %v375 = vpack.c.bf16 %v372, %v369
        %v377 = vunpack.c.l.b16 %v375
        %v378 = vunpack.c.h.b16 %v375
        %v379 = vpack.c.b16 %v377, %v377
        %v380 = vpack.c.b16 %v378, %v378
        %383 = vst [vmem:[%s234] sm:$0xf] %v379
        %384 = vst [vmem:[%s234 + $0x4] sm:$0xf] %v380
        %s385 = sand.u32 %s130, 1
        %s386 = scalar_lea.sflag [#allocation3], %s385
        %s387 = sand.u32 %s130, 1
        %s388 = smul.addr %s387, 8
        %s389 = scalar_lea.vmem [#allocation2], %s388
        // Predicated region
        $region33: #{patch_embeddings_pallas.1} parent=31 // pred_check
          %p390 = pneg %p140
        $region34: #{patch_embeddings_pallas.1} parent=31 // pred_check_branch
          %392 = sbr.rel (%p390) target = $region36
        $region35: #{patch_embeddings_pallas.1} parent=31 // pred_region
          %s393 = smul.u32 2, %s24
          %s395 = ssub.s32 128, 128
          %396 = vsyncadd %s386, %s395
          %s397 = sadd.s32 %s22, %s393
          %s398 = smul.addr %s23, 2
          %s399 = sadd.s32 %s397, %s398
          %s400 = smul.addr %s399, 64
          %s401 = scalar_lea.hbm %s3, %s400
          %s402 = sshll.u32 %s389, 4
          %s403 = int_to_ptr.vmem [resolvable:$true] %s402
          %408 = dma.vmem_to_hbm [thread:$0]  %s403, 128, %s401, %s386, 64, 64, 4
        $region36: #{patch_embeddings_pallas.1} parent=31 // pred_fallthru
          _
      $region32: #{patch_embeddings_pallas.1} parent=5 // pred_fallthru
        _
      %p409 = scmp.le.s32.totalorder 2, %s12
      // Predicated region
      $region37: #{patch_embeddings_pallas.1} parent=5 // pred_check
        %p410 = pneg %p409
      $region38: #{patch_embeddings_pallas.1} parent=5 // pred_check_branch
        %412 = sbr.rel (%p410) target = $region40
      $region39: #{patch_embeddings_pallas.1} parent=5 // pred_region
        %s413 = ssub.s32 %s12, 2
        // Predicated region
        $region41: #{patch_embeddings_pallas.1} parent=39 // pred_check
          %p414 = pneg %p146
        $region42: #{patch_embeddings_pallas.1} parent=39 // pred_check_branch
          %416 = sbr.rel (%p414) target = $region44
        $region43: #{patch_embeddings_pallas.1} parent=39 // pred_region
          %s417 = sand.u32 %s131, 1
          %s418 = scalar_lea.sflag [#allocation3], %s417
          %s419 = sand.u32 %s131, 1
          %s420 = smul.addr %s419, 8
          %s421 = scalar_lea.vmem [#allocation2], %s420
          %422 = dma.done %s418, 128
        $region44: #{patch_embeddings_pallas.1} parent=39 // pred_fallthru
          _
      $region40: #{patch_embeddings_pallas.1} parent=5 // pred_fallthru
        _
    $region6: #{patch_embeddings_pallas.1} parent=1 // loop_footer
      %s16 = sadd.s32 1, %s12
    $region7: #{patch_embeddings_pallas.1} parent=1 // loop_footer_branch
      %11 = sbr.rel target = $region3
    $region8: #{patch_embeddings_pallas.1} parent=1 // loop_exit
      _
    %423 = vsyncpa [#allocation3], 1
    %s424 = scalar_lea.sflag [#allocation3], 1
    %425 = vsyncpa %s424, 1

</llo_original>
